<compile_context>
chip_gen: v5e
topology: v5e:2x2
jax: 0.10.0
libtpu: 0.0.40
codegen_flags: <defaults>
</compile_context>

<pallas_src>
import functools

import jax
import jax.numpy as jnp
from jax.experimental import pallas as pl
from jax.experimental.pallas import tpu as pltpu

_LANE = 128
_SUBLANE = 8


def _round_up(n, m):
    return -(-n // m) * m


# ----------------------------------------------------------------------------
# Pallas kernel: fused MLP (all dense layers + tanh + final bias, scale folded)
# ----------------------------------------------------------------------------
def _fc_subnet_kernel(layer_meta, bias_meta, x_ref, slab_ref, out_ref):
    """layer_meta: tuple of (row_offset, in_dim, out_dim) per Linear layer
    (the last entry is the output layer, whose weights already include 1/dim).
    bias_meta: (row_offset, out_dim) of the (scaled) final bias inside slab."""
    h = x_ref[...]  # (block_b, dim) f32
    n_layers = len(layer_meta)
    for idx, (off, din, dout) in enumerate(layer_meta):
        w = slab_ref[off:off + din, 0:dout]          # static slice: no copy
        h = jnp.dot(h, w, preferred_element_type=jnp.float32)
        if idx < n_layers - 1:
            h = jnp.tanh(h)                          # hidden layers only
    boff, bdim = bias_meta
    b = slab_ref[boff:boff + 1, 0:bdim]              # (1, dim), broadcasts
    out_ref[...] = (h + b).astype(out_ref.dtype)


# ----------------------------------------------------------------------------
# Parameter packing: fold 1/dim into last layer, build a single weight slab
# ----------------------------------------------------------------------------
def pack_params(hidden_weights_t, w_last_t, b_last, dim):
    """Fold the final /dim into the last weight+bias and pack every parameter
    into one (rows, >=128) f32 slab so the kernel has a single weight input
    (one DMA descriptor instead of N+2)."""
    inv_dim = 1.0 / float(dim)
    mats = list(hidden_weights_t) + [w_last_t * inv_dim, b_last * inv_dim]
    width = max(_LANE, _round_up(max(m.shape[1] for m in mats), _LANE))
    blocks, meta = [], []
    rows = 0
    for m in mats:
        r, c = m.shape
        r_pad = _round_up(r, _SUBLANE)               # keep row slices 8-aligned
        blocks.append(jnp.pad(m.astype(jnp.float32),
                              ((0, r_pad - r), (0, width - c))))
        meta.append((rows, r, c))
        rows += r_pad
    slab = jnp.concatenate(blocks, axis=0)
    layer_meta = tuple(meta[:-1])                    # all Linear layers
    bias_meta = (meta[-1][0], meta[-1][2])           # final bias row / width
    return slab, layer_meta, bias_meta


# ----------------------------------------------------------------------------
# Wrapper: batch-tiled pallas_call (weights stay resident, batch axis parallel)
# ----------------------------------------------------------------------------
def fc_subnet_forward(x, slab, layer_meta, bias_meta, *, block_b=256):
    batch, dim = x.shape
    padded_batch = _round_up(batch, _SUBLANE)
    if padded_batch <= block_b:
        block_b = padded_batch                       # single tile, full array
    else:
        padded_batch = _round_up(batch, block_b)
    if padded_batch != batch:
        x = jnp.pad(x, ((0, padded_batch - batch), (0, 0)))

    grid = (padded_batch // block_b,)
    kernel = functools.partial(_fc_subnet_kernel, layer_meta, bias_meta)

    out = pl.pallas_call(
        kernel,
        out_shape=jax.ShapeDtypeStruct((padded_batch, dim), x.dtype),
        grid=grid,
        in_specs=[
            # activations: tiled over batch
            pl.BlockSpec((block_b, dim), lambda i: (i, 0)),
            # weight slab: same block every grid step -> VMEM-resident, 1 DMA
            pl.BlockSpec(slab.shape, lambda i: (0, 0)),
        ],
        out_specs=pl.BlockSpec((block_b, dim), lambda i: (i, 0)),
        compiler_params=pltpu.CompilerParams(
            dimension_semantics=("parallel",)),
    )(x, slab)
    return out[:batch]


# ----------------------------------------------------------------------------
# Deterministic parameter construction (mirrors nn.Linear shapes from __init__)
# ----------------------------------------------------------------------------
def init_params(key, dim, num_hiddens):
    layer_dims = [dim] + list(num_hiddens)
    hidden_weights_t = []
    keys = jax.random.split(key, len(layer_dims) + 1)
    # hidden Linear layers: weight (out, in), bias=False; PyTorch default init
    # is U(-1/sqrt(in), 1/sqrt(in)) — emulated deterministically in JAX.
    for i in range(len(layer_dims) - 1):
        fan_in = layer_dims[i]
        bound = 1.0 / (fan_in ** 0.5)
        w = jax.random.uniform(
            keys[i], (layer_dims[i + 1], layer_dims[i]),
            minval=-bound, maxval=bound, dtype=jnp.float32)
        hidden_weights_t.append(w.T)                 # pass (in, out) layout
    # last Linear: (dim, last_hidden) with bias
    fan_in = layer_dims[-1]
    bound = 1.0 / (fan_in ** 0.5)
    w_last = jax.random.uniform(
        keys[-2], (dim, layer_dims[-1]),
        minval=-bound, maxval=bound, dtype=jnp.float32)
    b_last = jax.random.uniform(
        keys[-1], (1, dim), minval=-bound, maxval=bound, dtype=jnp.float32)
    return hidden_weights_t, w_last.T, b_last


def reference_forward(x, hidden_weights_t, w_last_t, b_last, dim):
    h = x
    for w in hidden_weights_t:
        h = jnp.tanh(h @ w)
    y = h @ w_last_t + b_last
    return y / dim


if __name__ == "__main__":
    # config: dim=16, num_hiddens=[32, 32]; batch large enough to exercise the
    # batch grid (two 256-row tiles) while staying tiny in memory (32 KiB).
    dim = 16
    num_hiddens = [32, 32]
    batch = 512

    key = jax.random.PRNGKey(0)
    k_x, k_p = jax.random.split(key)
    x = jax.random.normal(k_x, (batch, dim), dtype=jnp.float32)
    hidden_weights_t, w_last_t, b_last = init_params(k_p, dim, num_hiddens)

    slab, layer_meta, bias_meta = pack_params(
        hidden_weights_t, w_last_t, b_last, dim)

    out = fc_subnet_forward(x, slab, layer_meta, bias_meta, block_b=256)
    out = jax.block_until_ready(out)

    ref = reference_forward(x, hidden_weights_t, w_last_t, b_last, dim)
    assert out.shape == (batch, dim)
    assert jnp.allclose(out, ref, atol=1e-5, rtol=1e-5)

    print("KERNEL_OK")
</pallas_src>

<mosaic_0001>
module attributes {stable_mosaic.version = 11 : i64} {
  func.func @_fc_subnet_kernel(%arg0: i32, %arg1: memref<256x16xf32, #tpu.memory_space<vmem>>, %arg2: memref<88x128xf32, #tpu.memory_space<vmem>>, %arg3: memref<256x16xf32, #tpu.memory_space<vmem>>) attributes {dimension_semantics = [#tpu.dimension_semantics<parallel>], iteration_bounds = array<i64: 2>, scalar_prefetch = 0 : i64, scratch_operands = 0 : i64, tpu.core_type = #tpu.core_type<tc>, window_params = [{transform_indices = @transform_0, window_bounds = array<i64: 256, 16>}, {pipeline_mode = #tpu.pipeline_mode<synchronous>, transform_indices = @transform_1, window_bounds = array<i64: 88, 128>}, {transform_indices = @transform_2, window_bounds = array<i64: 256, 16>}]} {
    %c0 = arith.constant 0 : index
    %c0_0 = arith.constant 0 : index
    %0 = vector.load %arg1[%c0, %c0_0] : memref<256x16xf32, #tpu.memory_space<vmem>>, vector<256x16xf32>
    %c0_1 = arith.constant 0 : index
    %c0_2 = arith.constant 0 : index
    %1 = vector.load %arg2[%c0_1, %c0_2] : memref<88x128xf32, #tpu.memory_space<vmem>>, vector<16x32xf32>
    %cst = arith.constant dense<0.000000e+00> : vector<256x32xf32>
    %2 = tpu.matmul %0, %1, %cst {dimension_numbers = #tpu.dot_dimension_numbers<[1], [0], [0], [1], [0, 0, 1, 1], [], []>} : vector<256x16xf32>, vector<16x32xf32>, vector<256x32xf32> -> vector<256x32xf32>
    %3 = math.tanh %2 : vector<256x32xf32>
    %c16 = arith.constant 16 : index
    %c0_3 = arith.constant 0 : index
    %4 = vector.load %arg2[%c16, %c0_3] : memref<88x128xf32, #tpu.memory_space<vmem>>, vector<32x32xf32>
    %cst_4 = arith.constant dense<0.000000e+00> : vector<256x32xf32>
    %5 = tpu.matmul %3, %4, %cst_4 {dimension_numbers = #tpu.dot_dimension_numbers<[1], [0], [0], [1], [0, 0, 1, 1], [], []>} : vector<256x32xf32>, vector<32x32xf32>, vector<256x32xf32> -> vector<256x32xf32>
    %6 = math.tanh %5 : vector<256x32xf32>
    %c48 = arith.constant 48 : index
    %c0_5 = arith.constant 0 : index
    %7 = vector.load %arg2[%c48, %c0_5] : memref<88x128xf32, #tpu.memory_space<vmem>>, vector<32x16xf32>
    %cst_6 = arith.constant dense<0.000000e+00> : vector<256x16xf32>
    %8 = tpu.matmul %6, %7, %cst_6 {dimension_numbers = #tpu.dot_dimension_numbers<[1], [0], [0], [1], [0, 0, 1, 1], [], []>} : vector<256x32xf32>, vector<32x16xf32>, vector<256x16xf32> -> vector<256x16xf32>
    %c80 = arith.constant 80 : index
    %c0_7 = arith.constant 0 : index
    %9 = vector.load %arg2[%c80, %c0_7] : memref<88x128xf32, #tpu.memory_space<vmem>>, vector<1x16xf32>
    %10 = vector.broadcast %9 : vector<1x16xf32> to vector<256x16xf32>
    %11 = arith.addf %8, %10 : vector<256x16xf32>
    %c0_8 = arith.constant 0 : index
    %c0_9 = arith.constant 0 : index
    %12 = vector.load %arg3[%c0_8, %c0_9] : memref<256x16xf32, #tpu.memory_space<vmem>>, vector<256x16xf32>
    tpu.vector_store %arg3[%c0_8, %c0_9], %11 {strides = array<i32>} : memref<256x16xf32, #tpu.memory_space<vmem>>, vector<256x16xf32>,
    return
  }
  func.func @transform_0(%arg0: i32) -> (i32, i32) {
    %c0_i32 = arith.constant 0 : i32
    %c0_i32_0 = arith.constant 0 : i32
    return %arg0, %c0_i32 : i32, i32
  }
  func.func @transform_1(%arg0: i32) -> (i32, i32) {
    %c0_i32 = arith.constant 0 : i32
    %c0_i32_0 = arith.constant 0 : i32
    %c0_i32_1 = arith.constant 0 : i32
    return %c0_i32, %c0_i32_0 : i32, i32
  }
  func.func @transform_2(%arg0: i32) -> (i32, i32) {
    %c0_i32 = arith.constant 0 : i32
    %c0_i32_0 = arith.constant 0 : i32
    return %arg0, %c0_i32 : i32, i32
  }
}

</mosaic_0001>

<llo_original>
// kernel: tpu_custom_call.1
$region0: #{tpu_custom_call.1}
  #allocation0 [shape = 'u32[]', space=smem, size = 0x4, offset = 0x4, fixed_abs, tag = 'smem constant byte address 0x4 - core index']
  #allocation1 [shape = 'u32[72,128]{1,0:T(1,128)}', space=vmem, size = 0x9000, scoped, tag = 'internal scratch']
  %s0 = inlined_call_operand.vmem [shape: f32[512,16], index: 0, kind: input, shape index: {}]
  %s1 = inlined_call_operand.vmem [shape: f32[88,128], index: 1, kind: input, shape index: {}]
  %s2 = inlined_call_operand.vmem [shape: f32[512,16], index: 2, kind: output, shape index: {}]
  %s3 = sld [smem:[#allocation0]]
  $region41: #{tpu_custom_call.1} parent=0
    _
  %s5 = ssub.s32 1, %s3
  %s6 = scalar_select 0, %s5, %s3
  loop: start=0, step=1, limit=4
  $region2: #{tpu_custom_call.1} parent=0 // loop_pre_header
    _
  $region3: #{tpu_custom_call.1} parent=0 // loop_header
    %s8 = sphi 0, %s12
    %p9 = scmp.ge.s32.totalorder %s8, 4
    %s18 = sphi 0, %s20
    %s21 = sphi 0, %s18
    %s22 = sphi 0, %s21
    %s38 = sphi 0, %s22
    %s42 = sphi 0, %s42
    %s44 = sphi 0, %s42
    %s45 = sphi 0, %s44
    %s59 = sphi 0, %s45
    %s65 = sphi 0, %s67
    %s68 = sphi 0, %s65
    %s69 = sphi 0, %s68
    %s85 = sphi 0, %s69
  $region4: #{tpu_custom_call.1} parent=0 // loop_header_branch
    %11 = sbr.rel (%p9) target = $region8
  $region5: #{tpu_custom_call.1} parent=0 // loop_body
    %s13 = ssub.s32 %s8, 1
    %s14 = ssub.s32 %s8, 2
    %s15 = sadd.s32 %s8, 1
    %s16 = ssub.s32 %s8, %s15
    %p17 = scmp.eq.s32.totalorder %s16, 0
    %s19 = sadd.s32 %s18, 1
    %s20 = scalar_select %p17, %s18, %s19
    %p23 = pneg %p17
    %p24 = scmp.eq.s32.totalorder %s8, 1
    %p25 = por %p23, %p24
    %p26 = scmp.ne.s32.totalorder %s18, %s21
    %p27 = scmp.eq.s32.totalorder %s8, 0
    %p28 = por %p26, %p27
    %p29 = scmp.ne.s32.totalorder %s18, %s21
    %p30 = scmp.eq.s32.totalorder %s13, 1
    %p31 = por %p29, %p30
    %p32 = scmp.ne.s32.totalorder %s21, %s22
    %p33 = scmp.eq.s32.totalorder %s13, 0
    %p34 = por %p32, %p33
    %p35 = scmp.ne.s32.totalorder %s21, %s22
    %p36 = scmp.eq.s32.totalorder %s14, 1
    %p37 = por %p35, %p36
    %p39 = scmp.ne.s32.totalorder %s22, %s38
    %p40 = scmp.eq.s32.totalorder %s14, 0
    %p41 = por %p39, %p40
    %s43 = sadd.s32 %s42, 1
    %p46 = scmp.eq.s32.totalorder %s8, 1
    %p47 = scmp.ne.s32.totalorder %s42, %s44
    %p48 = scmp.eq.s32.totalorder %s8, 0
    %p49 = por %p47, %p48
    %p50 = scmp.ne.s32.totalorder %s42, %s44
    %p51 = scmp.eq.s32.totalorder %s13, 1
    %p52 = por %p50, %p51
    %p53 = scmp.ne.s32.totalorder %s44, %s45
    %p54 = scmp.eq.s32.totalorder %s13, 0
    %p55 = por %p53, %p54
    %p56 = scmp.ne.s32.totalorder %s44, %s45
    %p57 = scmp.eq.s32.totalorder %s14, 1
    %p58 = por %p56, %p57
    %p60 = scmp.ne.s32.totalorder %s45, %s59
    %p61 = scmp.eq.s32.totalorder %s14, 0
    %p62 = por %p60, %p61
    %s63 = ssub.s32 %s8, %s15
    %p64 = scmp.eq.s32.totalorder %s63, 0
    %s66 = sadd.s32 %s65, 1
    %s67 = scalar_select %p64, %s65, %s66
    %p70 = pneg %p64
    %p71 = scmp.eq.s32.totalorder %s8, 1
    %p72 = por %p70, %p71
    %p73 = scmp.ne.s32.totalorder %s65, %s68
    %p74 = scmp.eq.s32.totalorder %s8, 0
    %p75 = por %p73, %p74
    %p76 = scmp.ne.s32.totalorder %s65, %s68
    %p77 = scmp.eq.s32.totalorder %s13, 1
    %p78 = por %p76, %p77
    %p79 = scmp.ne.s32.totalorder %s68, %s69
    %p80 = scmp.eq.s32.totalorder %s13, 0
    %p81 = por %p79, %p80
    %p82 = scmp.ne.s32.totalorder %s68, %s69
    %p83 = scmp.eq.s32.totalorder %s14, 1
    %p84 = por %p82, %p83
    %p86 = scmp.ne.s32.totalorder %s69, %s85
    %p87 = scmp.eq.s32.totalorder %s14, 0
    %p88 = por %p86, %p87
    %p89 = scmp.le.s32.totalorder 1, %s8
    %p90 = scmp.lt.s32.totalorder %s8, 3
    %p91 = pnand %p89, %p90
    %p92 = pneg %p91
    // Predicated region
    $region9: #{tpu_custom_call.1} parent=5 // pred_check
      _
    $region10: #{tpu_custom_call.1} parent=5 // pred_check_branch
      %94 = sbr.rel (%p91) target = $region12
    $region11: #{tpu_custom_call.1} parent=5 // pred_region
      %s95 = ssub.s32 %s8, 1
      // Predicated region
      $region13: #{tpu_custom_call.1} parent=11 // pred_check
        %p96 = pneg %p55
      $region14: #{tpu_custom_call.1} parent=11 // pred_check_branch
        %98 = sbr.rel (%p96) target = $region16
      $region15: #{tpu_custom_call.1} parent=11 // pred_region
        _
      $region16: #{tpu_custom_call.1} parent=11 // pred_fallthru
        _
    $region12: #{tpu_custom_call.1} parent=5 // pred_fallthru
      _
    %p99 = scmp.lt.s32.totalorder %s8, 2
    // Predicated region
    $region17: #{tpu_custom_call.1} parent=5 // pred_check
      %p100 = pneg %p99
    $region18: #{tpu_custom_call.1} parent=5 // pred_check_branch
      %102 = sbr.rel (%p100) target = $region20
    $region19: #{tpu_custom_call.1} parent=5 // pred_region
      // Predicated region
      $region21: #{tpu_custom_call.1} parent=19 // pred_check
        %p103 = pneg %p28
      $region22: #{tpu_custom_call.1} parent=19 // pred_check_branch
        %105 = sbr.rel (%p103) target = $region24
      $region23: #{tpu_custom_call.1} parent=19 // pred_region
        %s106 = smul.u32 32, %s8
        %p107 = scmp.lt.s32.totalorder %s106, 63
        %s108 = scalar_select %p107, %s106, 63
        %s109 = smul.addr %s108, 8
        %s110 = scalar_lea.vmem %s0, %s109
        %s111 = smul.u32 32, %s8
      $region24: #{tpu_custom_call.1} parent=19 // pred_fallthru
        _
    $region20: #{tpu_custom_call.1} parent=5 // pred_fallthru
      _
    %p112 = scmp.le.s32.totalorder 1, %s8
    %p113 = scmp.lt.s32.totalorder %s8, 3
    %p114 = pnand %p112, %p113
    %p115 = pneg %p114
    // Predicated region
    $region25: #{tpu_custom_call.1} parent=5 // pred_check
      _
    $region26: #{tpu_custom_call.1} parent=5 // pred_check_branch
      %117 = sbr.rel (%p114) target = $region28
    $region27: #{tpu_custom_call.1} parent=5 // pred_region
      %s118 = ssub.s32 %s8, 1
      %s119 = smul.u32 32, %s13
      %p120 = scmp.lt.s32.totalorder %s119, 63
      %s121 = scalar_select %p120, %s119, 63
      %s122 = smul.addr %s121, 8
      %s123 = scalar_lea.vmem %s0, %s122
      %p124 = pneg %p34
      %p125 = pneg %p31
      %p126 = pneg %p55
      %p127 = pneg %p52
      %p128 = pneg %p81
      %p129 = pneg %p78
      %s130 = smul.u32 32, %s13
      %p131 = scmp.lt.s32.totalorder %s130, 63
      %s132 = scalar_select %p131, %s130, 63
      %s133 = smul.addr %s132, 8
      %s134 = scalar_lea.vmem %s2, %s133
      %s135 = smul.u32 32, %s13
      %p136 = scmp.lt.s32.totalorder %s135, 63
      %s137 = scalar_select %p136, %s135, 63
      %s138 = smul.addr %s137, 8
      %s139 = scalar_lea.vmem %s0, %s138
      %s140 = smul.u32 32, %s13
      %s141 = smul.u32 32, %s13
      %p142 = scmp.lt.s32.totalorder %s141, 63
      %s143 = scalar_select %p142, %s141, 63
      %s144 = smul.addr %s143, 8
      %s145 = scalar_lea.vmem %s2, %s144
      %s146 = smul.u32 32, %s13
      %v147 = vld [vmem:[%s139] sm:$0xff]
      %v148 = vld [vmem:[%s139 + $0x8] sm:$0xff]
      %v149 = vld [vmem:[%s139 + $0x10] sm:$0xff]
      %v150 = vld [vmem:[%s139 + $0x18] sm:$0xff]
      %v151 = vld [vmem:[%s139 + $0x20] sm:$0xff]
      %v152 = vld [vmem:[%s139 + $0x28] sm:$0xff]
      %v153 = vld [vmem:[%s139 + $0x30] sm:$0xff]
      %v154 = vld [vmem:[%s139 + $0x38] sm:$0xff]
      %v155 = vld [vmem:[%s139 + $0x40] sm:$0xff]
      %v156 = vld [vmem:[%s139 + $0x48] sm:$0xff]
      %v157 = vld [vmem:[%s139 + $0x50] sm:$0xff]
      %v158 = vld [vmem:[%s139 + $0x58] sm:$0xff]
      %v159 = vld [vmem:[%s139 + $0x60] sm:$0xff]
      %v160 = vld [vmem:[%s139 + $0x68] sm:$0xff]
      %v161 = vld [vmem:[%s139 + $0x70] sm:$0xff]
      %v162 = vld [vmem:[%s139 + $0x78] sm:$0xff]
      %v163 = vld [vmem:[%s139 + $0x80] sm:$0xff]
      %v164 = vld [vmem:[%s139 + $0x88] sm:$0xff]
      %v165 = vld [vmem:[%s139 + $0x90] sm:$0xff]
      %v166 = vld [vmem:[%s139 + $0x98] sm:$0xff]
      %v167 = vld [vmem:[%s139 + $0xa0] sm:$0xff]
      %v168 = vld [vmem:[%s139 + $0xa8] sm:$0xff]
      %v169 = vld [vmem:[%s139 + $0xb0] sm:$0xff]
      %v170 = vld [vmem:[%s139 + $0xb8] sm:$0xff]
      %v171 = vld [vmem:[%s139 + $0xc0] sm:$0xff]
      %v172 = vld [vmem:[%s139 + $0xc8] sm:$0xff]
      %v173 = vld [vmem:[%s139 + $0xd0] sm:$0xff]
      %v174 = vld [vmem:[%s139 + $0xd8] sm:$0xff]
      %v175 = vld [vmem:[%s139 + $0xe0] sm:$0xff]
      %v176 = vld [vmem:[%s139 + $0xe8] sm:$0xff]
      %v177 = vld [vmem:[%s139 + $0xf0] sm:$0xff]
      %v178 = vld [vmem:[%s139 + $0xf8] sm:$0xff]
      %v179 = vld [vmem:[%s1] sm:$0xff]
      %v180 = vld [vmem:[%s1 + $0x8] sm:$0xff]
      %vm181 = vcmask 130048
      %v183 = vsel %vm181, %v147, 0
      %v186 = vsel %vm181, %v148, 0
      %v189 = vsel %vm181, %v149, 0
      %v192 = vsel %vm181, %v150, 0
      %v195 = vsel %vm181, %v151, 0
      %v198 = vsel %vm181, %v152, 0
      %v201 = vsel %vm181, %v153, 0
      %v204 = vsel %vm181, %v154, 0
      %v207 = vsel %vm181, %v155, 0
      %v210 = vsel %vm181, %v156, 0
      %v213 = vsel %vm181, %v157, 0
      %v216 = vsel %vm181, %v158, 0
      %v219 = vsel %vm181, %v159, 0
      %v222 = vsel %vm181, %v160, 0
      %v225 = vsel %vm181, %v161, 0
      %v228 = vsel %vm181, %v162, 0
      %v231 = vsel %vm181, %v163, 0
      %v234 = vsel %vm181, %v164, 0
      %v237 = vsel %vm181, %v165, 0
      %v240 = vsel %vm181, %v166, 0
      %v243 = vsel %vm181, %v167, 0
      %v246 = vsel %vm181, %v168, 0
      %v249 = vsel %vm181, %v169, 0
      %v252 = vsel %vm181, %v170, 0
      %v255 = vsel %vm181, %v171, 0
      %v258 = vsel %vm181, %v172, 0
      %v261 = vsel %vm181, %v173, 0
      %v264 = vsel %vm181, %v174, 0
      %v267 = vsel %vm181, %v175, 0
      %v270 = vsel %vm181, %v176, 0
      %v273 = vsel %vm181, %v177, 0
      %v276 = vsel %vm181, %v178, 0
      %278 = vmatpush.msra.mxu0 0.0
      %279 = vmatpush.msra.mxu0 0.0
      %280 = vmatpush.msra.mxu0 0.0
      %281 = vmatpush.msra.mxu0 0.0
      %282 = vmatpush.msra.mxu0 0.0
      %283 = vmatpush.msra.mxu0 0.0
      %284 = vmatpush.msra.mxu0 0.0
      %285 = vmatpush.msra.mxu0 0.0
      %286 = vmatpush.msra.mxu0 0.0
      %287 = vmatpush.msra.mxu0 0.0
      %288 = vmatpush.msra.mxu0 0.0
      %289 = vmatpush.msra.mxu0 0.0
      %290 = vmatpush.msra.mxu0 0.0
      %291 = vmatpush.msra.mxu0 0.0
      %292 = vmatpush.msra.mxu0 %v180
      %293 = vmatpush.msra.mxu0 %v179
      %294 = vmatmul.f32.gmra.mxu0 %v183
      %v295 = vpop.f32.mrf.mxu0
      %v296 = vadd.f32 0.0, %v295
      %297 = vmatmul.f32.gmra.mxu0 %v186
      %v298 = vpop.f32.mrf.mxu0
      %v299 = vadd.f32 0.0, %v298
      %300 = vmatmul.f32.gmra.mxu0 %v189
      %v301 = vpop.f32.mrf.mxu0
      %v302 = vadd.f32 0.0, %v301
      %303 = vmatmul.f32.gmra.mxu0 %v192
      %v304 = vpop.f32.mrf.mxu0
      %v305 = vadd.f32 0.0, %v304
      %306 = vmatmul.f32.gmra.mxu0 %v195
      %v307 = vpop.f32.mrf.mxu0
      %v308 = vadd.f32 0.0, %v307
      %309 = vmatmul.f32.gmra.mxu0 %v198
      %v310 = vpop.f32.mrf.mxu0
      %v311 = vadd.f32 0.0, %v310
      %312 = vmatmul.f32.gmra.mxu0 %v201
      %v313 = vpop.f32.mrf.mxu0
      %v314 = vadd.f32 0.0, %v313
      %315 = vmatmul.f32.gmra.mxu0 %v204
      %v316 = vpop.f32.mrf.mxu0
      %v317 = vadd.f32 0.0, %v316
      %318 = vmatmul.f32.gmra.mxu0 %v207
      %v319 = vpop.f32.mrf.mxu0
      %v320 = vadd.f32 0.0, %v319
      %321 = vmatmul.f32.gmra.mxu0 %v210
      %v322 = vpop.f32.mrf.mxu0
      %v323 = vadd.f32 0.0, %v322
      %324 = vmatmul.f32.gmra.mxu0 %v213
      %v325 = vpop.f32.mrf.mxu0
      %v326 = vadd.f32 0.0, %v325
      %327 = vmatmul.f32.gmra.mxu0 %v216
      %v328 = vpop.f32.mrf.mxu0
      %v329 = vadd.f32 0.0, %v328
      %330 = vmatmul.f32.gmra.mxu0 %v219
      %v331 = vpop.f32.mrf.mxu0
      %v332 = vadd.f32 0.0, %v331
      %333 = vmatmul.f32.gmra.mxu0 %v222
      %v334 = vpop.f32.mrf.mxu0
      %v335 = vadd.f32 0.0, %v334
      %336 = vmatmul.f32.gmra.mxu0 %v225
      %v337 = vpop.f32.mrf.mxu0
      %v338 = vadd.f32 0.0, %v337
      %339 = vmatmul.f32.gmra.mxu0 %v228
      %v340 = vpop.f32.mrf.mxu0
      %v341 = vadd.f32 0.0, %v340
      %342 = vmatmul.f32.gmra.mxu0 %v231
      %v343 = vpop.f32.mrf.mxu0
      %v344 = vadd.f32 0.0, %v343
      %345 = vmatmul.f32.gmra.mxu0 %v234
      %v346 = vpop.f32.mrf.mxu0
      %v347 = vadd.f32 0.0, %v346
      %348 = vmatmul.f32.gmra.mxu0 %v237
      %v349 = vpop.f32.mrf.mxu0
      %v350 = vadd.f32 0.0, %v349
      %351 = vmatmul.f32.gmra.mxu0 %v240
      %v352 = vpop.f32.mrf.mxu0
      %v353 = vadd.f32 0.0, %v352
      %354 = vmatmul.f32.gmra.mxu0 %v243
      %v355 = vpop.f32.mrf.mxu0
      %v356 = vadd.f32 0.0, %v355
      %357 = vmatmul.f32.gmra.mxu0 %v246
      %v358 = vpop.f32.mrf.mxu0
      %v359 = vadd.f32 0.0, %v358
      %360 = vmatmul.f32.gmra.mxu0 %v249
      %v361 = vpop.f32.mrf.mxu0
      %v362 = vadd.f32 0.0, %v361
      %363 = vmatmul.f32.gmra.mxu0 %v252
      %v364 = vpop.f32.mrf.mxu0
      %v365 = vadd.f32 0.0, %v364
      %366 = vmatmul.f32.gmra.mxu0 %v255
      %v367 = vpop.f32.mrf.mxu0
      %v368 = vadd.f32 0.0, %v367
      %369 = vmatmul.f32.gmra.mxu0 %v258
      %v370 = vpop.f32.mrf.mxu0
      %v371 = vadd.f32 0.0, %v370
      %372 = vmatmul.f32.gmra.mxu0 %v261
      %v373 = vpop.f32.mrf.mxu0
      %v374 = vadd.f32 0.0, %v373
      %375 = vmatmul.f32.gmra.mxu0 %v264
      %v376 = vpop.f32.mrf.mxu0
      %v377 = vadd.f32 0.0, %v376
      %378 = vmatmul.f32.gmra.mxu0 %v267
      %v379 = vpop.f32.mrf.mxu0
      %v380 = vadd.f32 0.0, %v379
      %381 = vmatmul.f32.gmra.mxu0 %v270
      %v382 = vpop.f32.mrf.mxu0
      %v383 = vadd.f32 0.0, %v382
      %384 = vmatmul.f32.gmra.mxu0 %v273
      %v385 = vpop.f32.mrf.mxu0
      %v386 = vadd.f32 0.0, %v385
      %387 = vmatmul.f32.gmra.mxu0 %v276
      %v388 = vpop.f32.mrf.mxu0
      %v389 = vadd.f32 0.0, %v388
      %390 = vdwg.mxu0
      %v391 = vtanh.pop %v296
      %v392 = vtanh.pop %v299
      %v393 = vtanh.pop %v302
      %v394 = vtanh.pop %v305
      %v395 = vtanh.pop %v308
      %v396 = vtanh.pop %v311
      %v397 = vtanh.pop %v314
      %v398 = vtanh.pop %v317
      %v399 = vtanh.pop %v320
      %v400 = vtanh.pop %v323
      %v401 = vtanh.pop %v326
      %v402 = vtanh.pop %v329
      %v403 = vtanh.pop %v332
      %v404 = vtanh.pop %v335
      %v405 = vtanh.pop %v338
      %v406 = vtanh.pop %v341
      %v407 = vtanh.pop %v344
      %v408 = vtanh.pop %v347
      %v409 = vtanh.pop %v350
      %v410 = vtanh.pop %v353
      %v411 = vtanh.pop %v356
      %v412 = vtanh.pop %v359
      %v413 = vtanh.pop %v362
      %v414 = vtanh.pop %v365
      %v415 = vtanh.pop %v368
      %v416 = vtanh.pop %v371
      %v417 = vtanh.pop %v374
      %v418 = vtanh.pop %v377
      %v419 = vtanh.pop %v380
      %v420 = vtanh.pop %v383
      %v421 = vtanh.pop %v386
      %v422 = vtanh.pop %v389
      %v423 = vld [vmem:[%s1 + $0x10] sm:$0xff]
      %v424 = vld [vmem:[%s1 + $0x18] sm:$0xff]
      %v425 = vld [vmem:[%s1 + $0x20] sm:$0xff]
      %v426 = vld [vmem:[%s1 + $0x28] sm:$0xff]
      %vm427 = vcmask 261120
      %v429 = vsel %vm427, %v391, 0
      %v432 = vsel %vm427, %v392, 0
      %v435 = vsel %vm427, %v393, 0
      %v438 = vsel %vm427, %v394, 0
      %v441 = vsel %vm427, %v395, 0
      %v444 = vsel %vm427, %v396, 0
      %v447 = vsel %vm427, %v397, 0
      %v450 = vsel %vm427, %v398, 0
      %v453 = vsel %vm427, %v399, 0
      %v456 = vsel %vm427, %v400, 0
      %v459 = vsel %vm427, %v401, 0
      %v462 = vsel %vm427, %v402, 0
      %v465 = vsel %vm427, %v403, 0
      %v468 = vsel %vm427, %v404, 0
      %v471 = vsel %vm427, %v405, 0
      %v474 = vsel %vm427, %v406, 0
      %v477 = vsel %vm427, %v407, 0
      %v480 = vsel %vm427, %v408, 0
      %v483 = vsel %vm427, %v409, 0
      %v486 = vsel %vm427, %v410, 0
      %v489 = vsel %vm427, %v411, 0
      %v492 = vsel %vm427, %v412, 0
      %v495 = vsel %vm427, %v413, 0
      %v498 = vsel %vm427, %v414, 0
      %v501 = vsel %vm427, %v415, 0
      %v504 = vsel %vm427, %v416, 0
      %v507 = vsel %vm427, %v417, 0
      %v510 = vsel %vm427, %v418, 0
      %v513 = vsel %vm427, %v419, 0
      %v516 = vsel %vm427, %v420, 0
      %v519 = vsel %vm427, %v421, 0
      %v522 = vsel %vm427, %v422, 0
      %524 = vmatpush.msra.mxu0 0.0
      %525 = vmatpush.msra.mxu0 0.0
      %526 = vmatpush.msra.mxu0 0.0
      %527 = vmatpush.msra.mxu0 0.0
      %528 = vmatpush.msra.mxu0 0.0
      %529 = vmatpush.msra.mxu0 0.0
      %530 = vmatpush.msra.mxu0 0.0
      %531 = vmatpush.msra.mxu0 0.0
      %532 = vmatpush.msra.mxu0 0.0
      %533 = vmatpush.msra.mxu0 0.0
      %534 = vmatpush.msra.mxu0 0.0
      %535 = vmatpush.msra.mxu0 0.0
      %536 = vmatpush.msra.mxu0 %v426
      %537 = vmatpush.msra.mxu0 %v425
      %538 = vmatpush.msra.mxu0 %v424
      %539 = vmatpush.msra.mxu0 %v423
      %540 = vmatmul.f32.gmra.mxu0 %v429
      %v541 = vpop.f32.mrf.mxu0
      %v542 = vadd.f32 0.0, %v541
      %543 = vmatmul.f32.gmra.mxu0 %v432
      %v544 = vpop.f32.mrf.mxu0
      %v545 = vadd.f32 0.0, %v544
      %546 = vmatmul.f32.gmra.mxu0 %v435
      %v547 = vpop.f32.mrf.mxu0
      %v548 = vadd.f32 0.0, %v547
      %549 = vmatmul.f32.gmra.mxu0 %v438
      %v550 = vpop.f32.mrf.mxu0
      %v551 = vadd.f32 0.0, %v550
      %552 = vmatmul.f32.gmra.mxu0 %v441
      %v553 = vpop.f32.mrf.mxu0
      %v554 = vadd.f32 0.0, %v553
      %555 = vmatmul.f32.gmra.mxu0 %v444
      %v556 = vpop.f32.mrf.mxu0
      %v557 = vadd.f32 0.0, %v556
      %558 = vmatmul.f32.gmra.mxu0 %v447
      %v559 = vpop.f32.mrf.mxu0
      %v560 = vadd.f32 0.0, %v559
      %561 = vmatmul.f32.gmra.mxu0 %v450
      %v562 = vpop.f32.mrf.mxu0
      %v563 = vadd.f32 0.0, %v562
      %564 = vmatmul.f32.gmra.mxu0 %v453
      %v565 = vpop.f32.mrf.mxu0
      %v566 = vadd.f32 0.0, %v565
      %567 = vmatmul.f32.gmra.mxu0 %v456
      %v568 = vpop.f32.mrf.mxu0
      %v569 = vadd.f32 0.0, %v568
      %570 = vmatmul.f32.gmra.mxu0 %v459
      %v571 = vpop.f32.mrf.mxu0
      %v572 = vadd.f32 0.0, %v571
      %573 = vmatmul.f32.gmra.mxu0 %v462
      %v574 = vpop.f32.mrf.mxu0
      %v575 = vadd.f32 0.0, %v574
      %576 = vmatmul.f32.gmra.mxu0 %v465
      %v577 = vpop.f32.mrf.mxu0
      %v578 = vadd.f32 0.0, %v577
      %579 = vmatmul.f32.gmra.mxu0 %v468
      %v580 = vpop.f32.mrf.mxu0
      %v581 = vadd.f32 0.0, %v580
      %582 = vmatmul.f32.gmra.mxu0 %v471
      %v583 = vpop.f32.mrf.mxu0
      %v584 = vadd.f32 0.0, %v583
      %585 = vmatmul.f32.gmra.mxu0 %v474
      %v586 = vpop.f32.mrf.mxu0
      %v587 = vadd.f32 0.0, %v586
      %588 = vmatmul.f32.gmra.mxu0 %v477
      %v589 = vpop.f32.mrf.mxu0
      %v590 = vadd.f32 0.0, %v589
      %591 = vmatmul.f32.gmra.mxu0 %v480
      %v592 = vpop.f32.mrf.mxu0
      %v593 = vadd.f32 0.0, %v592
      %594 = vmatmul.f32.gmra.mxu0 %v483
      %v595 = vpop.f32.mrf.mxu0
      %v596 = vadd.f32 0.0, %v595
      %597 = vmatmul.f32.gmra.mxu0 %v486
      %v598 = vpop.f32.mrf.mxu0
      %v599 = vadd.f32 0.0, %v598
      %600 = vmatmul.f32.gmra.mxu0 %v489
      %v601 = vpop.f32.mrf.mxu0
      %v602 = vadd.f32 0.0, %v601
      %603 = vmatmul.f32.gmra.mxu0 %v492
      %v604 = vpop.f32.mrf.mxu0
      %v605 = vadd.f32 0.0, %v604
      %606 = vmatmul.f32.gmra.mxu0 %v495
      %v607 = vpop.f32.mrf.mxu0
      %v608 = vadd.f32 0.0, %v607
      %609 = vmatmul.f32.gmra.mxu0 %v498
      %v610 = vpop.f32.mrf.mxu0
      %v611 = vadd.f32 0.0, %v610
      %612 = vmatmul.f32.gmra.mxu0 %v501
      %v613 = vpop.f32.mrf.mxu0
      %v614 = vadd.f32 0.0, %v613
      %615 = vmatmul.f32.gmra.mxu0 %v504
      %v616 = vpop.f32.mrf.mxu0
      %v617 = vadd.f32 0.0, %v616
      %618 = vmatmul.f32.gmra.mxu0 %v507
      %v619 = vpop.f32.mrf.mxu0
      %v620 = vadd.f32 0.0, %v619
      %621 = vmatmul.f32.gmra.mxu0 %v510
      %v622 = vpop.f32.mrf.mxu0
      %v623 = vadd.f32 0.0, %v622
      %624 = vmatmul.f32.gmra.mxu0 %v513
      %v625 = vpop.f32.mrf.mxu0
      %v626 = vadd.f32 0.0, %v625
      %627 = vmatmul.f32.gmra.mxu0 %v516
      %v628 = vpop.f32.mrf.mxu0
      %v629 = vadd.f32 0.0, %v628
      %630 = vmatmul.f32.gmra.mxu0 %v519
      %v631 = vpop.f32.mrf.mxu0
      %v632 = vadd.f32 0.0, %v631
      %633 = vmatmul.f32.gmra.mxu0 %v522
      %v634 = vpop.f32.mrf.mxu0
      %v635 = vadd.f32 0.0, %v634
      %636 = vdwg.mxu0
      %v637 = vtanh.pop %v542
      %v638 = vtanh.pop %v545
      %v639 = vtanh.pop %v548
      %v640 = vtanh.pop %v551
      %v641 = vtanh.pop %v554
      %v642 = vtanh.pop %v557
      %v643 = vtanh.pop %v560
      %v644 = vtanh.pop %v563
      %v645 = vtanh.pop %v566
      %v646 = vtanh.pop %v569
      %v647 = vtanh.pop %v572
      %v648 = vtanh.pop %v575
      %v649 = vtanh.pop %v578
      %v650 = vtanh.pop %v581
      %v651 = vtanh.pop %v584
      %v652 = vtanh.pop %v587
      %v653 = vtanh.pop %v590
      %v654 = vtanh.pop %v593
      %v655 = vtanh.pop %v596
      %v656 = vtanh.pop %v599
      %v657 = vtanh.pop %v602
      %v658 = vtanh.pop %v605
      %v659 = vtanh.pop %v608
      %v660 = vtanh.pop %v611
      %v661 = vtanh.pop %v614
      %v662 = vtanh.pop %v617
      %v663 = vtanh.pop %v620
      %v664 = vtanh.pop %v623
      %v665 = vtanh.pop %v626
      %v666 = vtanh.pop %v629
      %v667 = vtanh.pop %v632
      %v668 = vtanh.pop %v635
      %v669 = vld [vmem:[%s1 + $0x30] sm:$0xff]
      %v670 = vld [vmem:[%s1 + $0x38] sm:$0xff]
      %v671 = vld [vmem:[%s1 + $0x40] sm:$0xff]
      %v672 = vld [vmem:[%s1 + $0x48] sm:$0xff]
      %v673 = vld [vmem:[%s1 + $0x50] sm:$0x1]
      %v674 = vperm.slane %v673, 0
      %v676 = vsel %vm427, %v637, 0
      %v679 = vsel %vm427, %v638, 0
      %v682 = vsel %vm427, %v639, 0
      %v685 = vsel %vm427, %v640, 0
      %v688 = vsel %vm427, %v641, 0
      %v691 = vsel %vm427, %v642, 0
      %v694 = vsel %vm427, %v643, 0
      %v697 = vsel %vm427, %v644, 0
      %v700 = vsel %vm427, %v645, 0
      %v703 = vsel %vm427, %v646, 0
      %v706 = vsel %vm427, %v647, 0
      %v709 = vsel %vm427, %v648, 0
      %v712 = vsel %vm427, %v649, 0
      %v715 = vsel %vm427, %v650, 0
      %v718 = vsel %vm427, %v651, 0
      %v721 = vsel %vm427, %v652, 0
      %v724 = vsel %vm427, %v653, 0
      %v727 = vsel %vm427, %v654, 0
      %v730 = vsel %vm427, %v655, 0
      %v733 = vsel %vm427, %v656, 0
      %v736 = vsel %vm427, %v657, 0
      %v739 = vsel %vm427, %v658, 0
      %v742 = vsel %vm427, %v659, 0
      %v745 = vsel %vm427, %v660, 0
      %v748 = vsel %vm427, %v661, 0
      %v751 = vsel %vm427, %v662, 0
      %v754 = vsel %vm427, %v663, 0
      %v757 = vsel %vm427, %v664, 0
      %v760 = vsel %vm427, %v665, 0
      %v763 = vsel %vm427, %v666, 0
      %v766 = vsel %vm427, %v667, 0
      %v769 = vsel %vm427, %v668, 0
      %771 = vmatpush.msra.mxu0 0.0
      %772 = vmatpush.msra.mxu0 0.0
      %773 = vmatpush.msra.mxu0 0.0
      %774 = vmatpush.msra.mxu0 0.0
      %775 = vmatpush.msra.mxu0 0.0
      %776 = vmatpush.msra.mxu0 0.0
      %777 = vmatpush.msra.mxu0 0.0
      %778 = vmatpush.msra.mxu0 0.0
      %779 = vmatpush.msra.mxu0 0.0
      %780 = vmatpush.msra.mxu0 0.0
      %781 = vmatpush.msra.mxu0 0.0
      %782 = vmatpush.msra.mxu0 0.0
      %783 = vmatpush.msra.mxu0 %v672
      %784 = vmatpush.msra.mxu0 %v671
      %785 = vmatpush.msra.mxu0 %v670
      %786 = vmatpush.msra.mxu0 %v669
      %787 = vmatmul.f32.gmra.mxu0 %v676
      %v788 = vpop.f32.mrf.mxu0
      %v789 = vadd.f32 %v674, %v788
      %790 = vmatmul.f32.gmra.mxu0 %v679
      %v791 = vpop.f32.mrf.mxu0
      %v792 = vadd.f32 %v674, %v791
      %793 = vmatmul.f32.gmra.mxu0 %v682
      %v794 = vpop.f32.mrf.mxu0
      %v795 = vadd.f32 %v674, %v794
      %796 = vmatmul.f32.gmra.mxu0 %v685
      %v797 = vpop.f32.mrf.mxu0
      %v798 = vadd.f32 %v674, %v797
      %799 = vmatmul.f32.gmra.mxu0 %v688
      %v800 = vpop.f32.mrf.mxu0
      %v801 = vadd.f32 %v674, %v800
      %802 = vmatmul.f32.gmra.mxu0 %v691
      %v803 = vpop.f32.mrf.mxu0
      %v804 = vadd.f32 %v674, %v803
      %805 = vmatmul.f32.gmra.mxu0 %v694
      %v806 = vpop.f32.mrf.mxu0
      %v807 = vadd.f32 %v674, %v806
      %808 = vmatmul.f32.gmra.mxu0 %v697
      %v809 = vpop.f32.mrf.mxu0
      %v810 = vadd.f32 %v674, %v809
      %811 = vmatmul.f32.gmra.mxu0 %v700
      %v812 = vpop.f32.mrf.mxu0
      %v813 = vadd.f32 %v674, %v812
      %814 = vmatmul.f32.gmra.mxu0 %v703
      %v815 = vpop.f32.mrf.mxu0
      %v816 = vadd.f32 %v674, %v815
      %817 = vmatmul.f32.gmra.mxu0 %v706
      %v818 = vpop.f32.mrf.mxu0
      %v819 = vadd.f32 %v674, %v818
      %820 = vmatmul.f32.gmra.mxu0 %v709
      %v821 = vpop.f32.mrf.mxu0
      %v822 = vadd.f32 %v674, %v821
      %823 = vmatmul.f32.gmra.mxu0 %v712
      %v824 = vpop.f32.mrf.mxu0
      %v825 = vadd.f32 %v674, %v824
      %826 = vmatmul.f32.gmra.mxu0 %v715
      %v827 = vpop.f32.mrf.mxu0
      %v828 = vadd.f32 %v674, %v827
      %829 = vmatmul.f32.gmra.mxu0 %v718
      %v830 = vpop.f32.mrf.mxu0
      %v831 = vadd.f32 %v674, %v830
      %832 = vmatmul.f32.gmra.mxu0 %v721
      %v833 = vpop.f32.mrf.mxu0
      %v834 = vadd.f32 %v674, %v833
      %835 = vmatmul.f32.gmra.mxu0 %v724
      %v836 = vpop.f32.mrf.mxu0
      %v837 = vadd.f32 %v674, %v836
      %838 = vmatmul.f32.gmra.mxu0 %v727
      %v839 = vpop.f32.mrf.mxu0
      %v840 = vadd.f32 %v674, %v839
      %841 = vmatmul.f32.gmra.mxu0 %v730
      %v842 = vpop.f32.mrf.mxu0
      %v843 = vadd.f32 %v674, %v842
      %844 = vmatmul.f32.gmra.mxu0 %v733
      %v845 = vpop.f32.mrf.mxu0
      %v846 = vadd.f32 %v674, %v845
      %847 = vmatmul.f32.gmra.mxu0 %v736
      %v848 = vpop.f32.mrf.mxu0
      %v849 = vadd.f32 %v674, %v848
      %850 = vmatmul.f32.gmra.mxu0 %v739
      %v851 = vpop.f32.mrf.mxu0
      %v852 = vadd.f32 %v674, %v851
      %853 = vmatmul.f32.gmra.mxu0 %v742
      %v854 = vpop.f32.mrf.mxu0
      %v855 = vadd.f32 %v674, %v854
      %856 = vmatmul.f32.gmra.mxu0 %v745
      %v857 = vpop.f32.mrf.mxu0
      %v858 = vadd.f32 %v674, %v857
      %859 = vmatmul.f32.gmra.mxu0 %v748
      %v860 = vpop.f32.mrf.mxu0
      %v861 = vadd.f32 %v674, %v860
      %862 = vmatmul.f32.gmra.mxu0 %v751
      %v863 = vpop.f32.mrf.mxu0
      %v864 = vadd.f32 %v674, %v863
      %865 = vmatmul.f32.gmra.mxu0 %v754
      %v866 = vpop.f32.mrf.mxu0
      %v867 = vadd.f32 %v674, %v866
      %868 = vmatmul.f32.gmra.mxu0 %v757
      %v869 = vpop.f32.mrf.mxu0
      %v870 = vadd.f32 %v674, %v869
      %871 = vmatmul.f32.gmra.mxu0 %v760
      %v872 = vpop.f32.mrf.mxu0
      %v873 = vadd.f32 %v674, %v872
      %874 = vmatmul.f32.gmra.mxu0 %v763
      %v875 = vpop.f32.mrf.mxu0
      %v876 = vadd.f32 %v674, %v875
      %877 = vmatmul.f32.gmra.mxu0 %v766
      %v878 = vpop.f32.mrf.mxu0
      %v879 = vadd.f32 %v674, %v878
      %880 = vmatmul.f32.gmra.mxu0 %v769
      %v881 = vpop.f32.mrf.mxu0
      %v882 = vadd.f32 %v674, %v881
      %883 = vdwg.mxu0
      %884 = vst.msk [vmem:[%s145] sm:$0xff] %vm181, %v789
      %885 = vst.msk [vmem:[%s145 + $0x8] sm:$0xff] %vm181, %v792
      %886 = vst.msk [vmem:[%s145 + $0x10] sm:$0xff] %vm181, %v795
      %887 = vst.msk [vmem:[%s145 + $0x18] sm:$0xff] %vm181, %v798
      %888 = vst.msk [vmem:[%s145 + $0x20] sm:$0xff] %vm181, %v801
      %889 = vst.msk [vmem:[%s145 + $0x28] sm:$0xff] %vm181, %v804
      %890 = vst.msk [vmem:[%s145 + $0x30] sm:$0xff] %vm181, %v807
      %891 = vst.msk [vmem:[%s145 + $0x38] sm:$0xff] %vm181, %v810
      %892 = vst.msk [vmem:[%s145 + $0x40] sm:$0xff] %vm181, %v813
      %893 = vst.msk [vmem:[%s145 + $0x48] sm:$0xff] %vm181, %v816
      %894 = vst.msk [vmem:[%s145 + $0x50] sm:$0xff] %vm181, %v819
      %895 = vst.msk [vmem:[%s145 + $0x58] sm:$0xff] %vm181, %v822
      %896 = vst.msk [vmem:[%s145 + $0x60] sm:$0xff] %vm181, %v825
      %897 = vst.msk [vmem:[%s145 + $0x68] sm:$0xff] %vm181, %v828
      %898 = vst.msk [vmem:[%s145 + $0x70] sm:$0xff] %vm181, %v831
      %899 = vst.msk [vmem:[%s145 + $0x78] sm:$0xff] %vm181, %v834
      %900 = vst.msk [vmem:[%s145 + $0x80] sm:$0xff] %vm181, %v837
      %901 = vst.msk [vmem:[%s145 + $0x88] sm:$0xff] %vm181, %v840
      %902 = vst.msk [vmem:[%s145 + $0x90] sm:$0xff] %vm181, %v843
      %903 = vst.msk [vmem:[%s145 + $0x98] sm:$0xff] %vm181, %v846
      %904 = vst.msk [vmem:[%s145 + $0xa0] sm:$0xff] %vm181, %v849
      %905 = vst.msk [vmem:[%s145 + $0xa8] sm:$0xff] %vm181, %v852
      %906 = vst.msk [vmem:[%s145 + $0xb0] sm:$0xff] %vm181, %v855
      %907 = vst.msk [vmem:[%s145 + $0xb8] sm:$0xff] %vm181, %v858
      %908 = vst.msk [vmem:[%s145 + $0xc0] sm:$0xff] %vm181, %v861
      %909 = vst.msk [vmem:[%s145 + $0xc8] sm:$0xff] %vm181, %v864
      %910 = vst.msk [vmem:[%s145 + $0xd0] sm:$0xff] %vm181, %v867
      %911 = vst.msk [vmem:[%s145 + $0xd8] sm:$0xff] %vm181, %v870
      %912 = vst.msk [vmem:[%s145 + $0xe0] sm:$0xff] %vm181, %v873
      %913 = vst.msk [vmem:[%s145 + $0xe8] sm:$0xff] %vm181, %v876
      %914 = vst.msk [vmem:[%s145 + $0xf0] sm:$0xff] %vm181, %v879
      %915 = vst.msk [vmem:[%s145 + $0xf8] sm:$0xff] %vm181, %v882
      %s916 = smul.u32 32, %s13
      %p917 = scmp.lt.s32.totalorder %s916, 63
      %s918 = scalar_select %p917, %s916, 63
      %s919 = smul.addr %s918, 8
      %s920 = scalar_lea.vmem %s2, %s919
      // Predicated region
      $region29: #{tpu_custom_call.1} parent=27 // pred_check
        %p921 = pneg %p78
      $region30: #{tpu_custom_call.1} parent=27 // pred_check_branch
        %923 = sbr.rel (%p921) target = $region32
      $region31: #{tpu_custom_call.1} parent=27 // pred_region
        %s924 = smul.u32 32, %s13
      $region32: #{tpu_custom_call.1} parent=27 // pred_fallthru
        _
    $region28: #{tpu_custom_call.1} parent=5 // pred_fallthru
      _
    %p925 = scmp.le.s32.totalorder 2, %s8
    // Predicated region
    $region33: #{tpu_custom_call.1} parent=5 // pred_check
      %p926 = pneg %p925
    $region34: #{tpu_custom_call.1} parent=5 // pred_check_branch
      %928 = sbr.rel (%p926) target = $region36
    $region35: #{tpu_custom_call.1} parent=5 // pred_region
      %s929 = ssub.s32 %s8, 2
      // Predicated region
      $region37: #{tpu_custom_call.1} parent=35 // pred_check
        %p930 = pneg %p84
      $region38: #{tpu_custom_call.1} parent=35 // pred_check_branch
        %932 = sbr.rel (%p930) target = $region40
      $region39: #{tpu_custom_call.1} parent=35 // pred_region
        %s933 = smul.u32 32, %s14
        %p934 = scmp.lt.s32.totalorder %s933, 63
        %s935 = scalar_select %p934, %s933, 63
        %s936 = smul.addr %s935, 8
        %s937 = scalar_lea.vmem %s2, %s936
      $region40: #{tpu_custom_call.1} parent=35 // pred_fallthru
        _
    $region36: #{tpu_custom_call.1} parent=5 // pred_fallthru
      _
  $region6: #{tpu_custom_call.1} parent=0 // loop_footer
    %s12 = sadd.s32 1, %s8
  $region7: #{tpu_custom_call.1} parent=0 // loop_footer_branch
    %7 = sbr.rel target = $region3
  $region8: #{tpu_custom_call.1} parent=0 // loop_exit
    _

</llo_original>
